<compile_context>
chip_gen: v5e
topology: v5e:2x2
jax: 0.10.0
libtpu: 0.0.40
codegen_flags: <defaults>
</compile_context>

<pallas_src>
import jax
import jax.numpy as jnp
from jax import lax
from jax.experimental import pallas as pl
from jax.experimental.pallas import tpu as pltpu


def _stride_loss_kernel(pred_ref, label_ref, out_ref, acc_ref):
    """grid = (batch, spatial_tiles).  Accumulates elementwise weighted-BCE
    contributions into a VMEM tile; reduces once per batch element."""
    s = pl.program_id(1)

    x = pred_ref[...].astype(jnp.float32)          # (1, C, T) logits, f32 math
    lab = label_ref[...]                           # (1, 1, T) int32 raw labels
    neg = lab < 0                                  # ignore mask
    abs_lab = jnp.where(neg, -lab, lab)            # all-positive labels

    # narrow class iota; the equality compare broadcasts it across lanes.
    cls = lax.broadcasted_iota(jnp.int32, (1, x.shape[1], 1), 1)
    onehot = abs_lab == cls                        # (1, C, T) bool

    # numerically-stable BCE-with-logits vs. the one-hot target.  Ignored
    # pixels carry weight 0 in the reference, so one select zeroes them.
    bce = (jnp.maximum(x, 0.0)
           - jnp.where(onehot, x, 0.0)
           + jnp.log1p(jnp.exp(-jnp.abs(x))))
    contrib = jnp.where(neg, 0.0, bce)             # (1, C, T)

    @pl.when(s == 0)
    def _():
        acc_ref[...] = jnp.zeros_like(acc_ref)

    acc_ref[...] += contrib                        # pure VPU accumulation

    @pl.when(s == pl.num_programs(1) - 1)
    def _():
        # single cross-lane reduce per batch element; mean scaling in wrapper.
        out_ref[...] = jnp.zeros_like(out_ref) + jnp.sum(acc_ref[...])


def _pick_hw_tile(hw, max_tile=2048):
    """Largest multiple of 128 that divides hw and is <= max_tile; else hw
    (a block equal to the full lane dim is always legal)."""
    if hw % 128 != 0:
        return hw
    best = 128
    t = 128
    while t <= min(hw, max_tile):
        if hw % t == 0:
            best = t
        t += 128
    return best


def stride_loss(pred_nchw, label_n1hw, num_classes, max_hw_tile=2048):
    """Single-stride loss: BCE-with-logits vs. one-hot(+ignore) target."""
    N, C, H, W = pred_nchw.shape
    assert C == num_classes
    HW = H * W

    # Keep the model's native dtype (e.g. bf16) in HBM -- no wrapper upcast.
    pred = pred_nchw.reshape(N, C, HW)
    label = label_n1hw.reshape(N, 1, HW).astype(jnp.int32)

    T = _pick_hw_tile(HW, max_hw_tile)
    S = HW // T
    inv_total = 1.0 / float(N * C * HW)

    per_batch = pl.pallas_call(
        _stride_loss_kernel,
        out_shape=jax.ShapeDtypeStruct((N, 1, 1), jnp.float32),
        grid_spec=pltpu.PrefetchScalarGridSpec(
            num_scalar_prefetch=0,
            grid=(N, S),
            in_specs=[
                pl.BlockSpec((1, C, T), lambda n, s: (n, 0, s)),
                pl.BlockSpec((1, 1, T), lambda n, s: (n, 0, s)),
            ],
            out_specs=pl.BlockSpec((1, 1, 1), lambda n, s: (n, 0, 0)),
            scratch_shapes=[pltpu.VMEM((1, C, T), jnp.float32)],
        ),
        compiler_params=pltpu.CompilerParams(
            # batch axis is independent (shardable across v7x TensorCores);
            # the spatial axis carries the accumulator -> sequential.
            dimension_semantics=("parallel", "arbitrary")),
    )(pred, label)

    # Tiny epilogue in XLA: sum the N partials, apply mean normalization.
    return jnp.sum(per_batch) * inv_total


class MultiStrideLosses:
    """Pallas port of cap.models.losses.seg_loss.MultiStrideLosses."""

    def __init__(self, num_classes, out_strides, loss_weights=None):
        self.num_classes = num_classes
        if loss_weights is not None:
            assert len(loss_weights) == len(out_strides)
        else:
            loss_weights = [1.0] * len(out_strides)
        self.out_strides = out_strides
        self.loss_weights = loss_weights

    def __call__(self, preds, targets):
        assert len(preds) == len(targets) == len(self.loss_weights)
        # TODO(synk): for very small feature maps a fused single pallas_call
        # (or plain XLA) would amortize per-call launch cost across strides.
        losses = {}
        for pred, target, stride, lw in zip(
                preds, targets, self.out_strides, self.loss_weights):
            losses[f"stride_{stride}_loss"] = (
                stride_loss(pred, target, self.num_classes) * lw)
        return losses


# ---------------- pure-JAX reference (mirrors the PyTorch semantics) ---------
def _reference_loss(pred, target, num_classes, loss_weight):
    pred = pred.astype(jnp.float32)
    neg = target < 0
    all_pos = jnp.where(neg, -target, target)
    oh = jax.nn.one_hot(all_pos, num_classes, dtype=jnp.int32)   # (N,1,H,W,C)
    oh = jnp.where(neg[..., None], -1, oh)
    oh = jnp.squeeze(oh, axis=1)                                 # (N,H,W,C)
    tgt = jnp.transpose(oh, (0, 3, 1, 2)).astype(jnp.float32)    # (N,C,H,W)
    w = (tgt != -1).astype(jnp.float32)
    bce = (jnp.maximum(pred, 0.0) - pred * tgt
           + jnp.log1p(jnp.exp(-jnp.abs(pred))))
    return jnp.mean(w * bce) * loss_weight


if __name__ == "__main__":
    key = jax.random.PRNGKey(0)
    num_classes = 4
    out_strides = [8, 16]
    loss_weights = [1.0, 0.5]
    N = 2
    # stride -> feature-map side length.  64x64 => HW=4096, tiled into 2
    # spatial grid steps (exercises the accumulator path); 16x16 => 1 step.
    spatial = {8: 64, 16: 16}

    preds, targets = [], []
    for s in out_strides:
        key, kp, kt = jax.random.split(key, 3)
        hw = spatial[s]
        preds.append(jax.random.normal(kp, (N, num_classes, hw, hw),
                                       dtype=jnp.float32))
        # labels in (-(C-1), C-1]; negative = ignore
        targets.append(jax.random.randint(
            kt, (N, 1, hw, hw), minval=-(num_classes - 1),
            maxval=num_classes, dtype=jnp.int32))

    module = MultiStrideLosses(num_classes, out_strides, loss_weights)
    losses = jax.block_until_ready(module(preds, targets))

    for pred, tgt, s, lw in zip(preds, targets, out_strides, loss_weights):
        ref = _reference_loss(pred, tgt, num_classes, lw)
        got = losses[f"stride_{s}_loss"]
        assert jnp.allclose(got, ref, rtol=3e-5, atol=1e-6), (s, got, ref)

    # bf16 preds go straight into the kernel (no wrapper upcast); math is f32.
    pred_bf16 = preds[0].astype(jnp.bfloat16)
    got_bf16 = jax.block_until_ready(
        stride_loss(pred_bf16, targets[0], num_classes))
    ref_bf16 = _reference_loss(pred_bf16.astype(jnp.float32), targets[0],
                               num_classes, 1.0)
    assert jnp.allclose(got_bf16, ref_bf16, rtol=3e-5, atol=1e-6), (
        got_bf16, ref_bf16)

    print("KERNEL_OK")
</pallas_src>

<mosaic_0001>
module attributes {stable_mosaic.version = 11 : i64} {
  func.func @_stride_loss_kernel(%arg0: i32, %arg1: i32, %arg2: memref<1x4x2048xf32, #tpu.memory_space<vmem>>, %arg3: memref<1x1x2048xi32, #tpu.memory_space<vmem>>, %arg4: memref<1x1x1xf32, #tpu.memory_space<vmem>>, %arg5: memref<1x4x2048xf32, #tpu.memory_space<vmem>>) attributes {dimension_semantics = [#tpu.dimension_semantics<parallel>, #tpu.dimension_semantics<arbitrary>], iteration_bounds = array<i64: 2, 2>, scalar_prefetch = 0 : i64, scratch_operands = 1 : i64, tpu.core_type = #tpu.core_type<tc>, window_params = [{transform_indices = @transform_0, window_bounds = array<i64: 1, 4, 2048>}, {transform_indices = @transform_1, window_bounds = array<i64: 1, 1, 2048>}, {transform_indices = @transform_2, window_bounds = array<i64: 1, 1, 1>}]} {
    %c0 = arith.constant 0 : index
    %c0_0 = arith.constant 0 : index
    %c0_1 = arith.constant 0 : index
    %0 = vector.load %arg2[%c0, %c0_0, %c0_1] : memref<1x4x2048xf32, #tpu.memory_space<vmem>>, vector<1x4x2048xf32>
    %c0_2 = arith.constant 0 : index
    %c0_3 = arith.constant 0 : index
    %c0_4 = arith.constant 0 : index
    %1 = vector.load %arg3[%c0_2, %c0_3, %c0_4] : memref<1x1x2048xi32, #tpu.memory_space<vmem>>, vector<1x1x2048xi32>
    %c0_i32 = arith.constant 0 : i32
    %2 = vector.broadcast %c0_i32 : i32 to vector<1x1x2048xi32>
    %3 = arith.cmpi slt, %1, %2 : vector<1x1x2048xi32>
    %c0_i32_5 = arith.constant 0 : i32
    %4 = vector.broadcast %c0_i32_5 : i32 to vector<1x1x2048xi32>
    %5 = arith.subi %4, %1 : vector<1x1x2048xi32>
    %6 = arith.select %3, %5, %1 : vector<1x1x2048xi1>, vector<1x1x2048xi32>
    %7 = tpu.iota {dimensions = array<i32: 1>} : vector<1x4x1xi32>
    %8 = vector.broadcast %6 : vector<1x1x2048xi32> to vector<1x4x2048xi32>
    %9 = vector.broadcast %7 : vector<1x4x1xi32> to vector<1x4x2048xi32>
    %10 = arith.cmpi eq, %8, %9 : vector<1x4x2048xi32>
    %cst = arith.constant 0.000000e+00 : f32
    %11 = vector.broadcast %cst : f32 to vector<1x4x2048xf32>
    %12 = arith.maximumf %0, %11 : vector<1x4x2048xf32>
    %cst_6 = arith.constant 0.000000e+00 : f32
    %13 = vector.broadcast %cst_6 : f32 to vector<1x4x2048xf32>
    %14 = arith.select %10, %0, %13 : vector<1x4x2048xi1>, vector<1x4x2048xf32>
    %15 = arith.subf %12, %14 : vector<1x4x2048xf32>
    %16 = math.absf %0 : vector<1x4x2048xf32>
    %cst_7 = arith.constant 0.000000e+00 : f32
    %17 = vector.broadcast %cst_7 : f32 to vector<1x4x2048xf32>
    %18 = arith.subf %17, %16 : vector<1x4x2048xf32>
    %19 = math.exp %18 : vector<1x4x2048xf32>
    %20 = math.log1p %19 : vector<1x4x2048xf32>
    %21 = arith.addf %15, %20 : vector<1x4x2048xf32>
    %cst_8 = arith.constant 0.000000e+00 : f32
    %22 = vector.shape_cast %3 : vector<1x1x2048xi1> to vector<1x1x2048xi1>
    %23 = vector.broadcast %22 : vector<1x1x2048xi1> to vector<1x4x2048xi1>
    %24 = vector.broadcast %cst_8 : f32 to vector<1x4x2048xf32>
    %25 = arith.select %23, %24, %21 : vector<1x4x2048xi1>, vector<1x4x2048xf32>
    %c0_i32_9 = arith.constant 0 : i32
    %26 = arith.cmpi eq, %arg1, %c0_i32_9 : i32
    %27 = arith.extui %26 : i1 to i32
    %c0_i32_10 = arith.constant 0 : i32
    %28 = arith.cmpi ne, %27, %c0_i32_10 : i32
    scf.if %28 {
      %cst_18 = arith.constant 0.000000e+00 : f32
      %35 = vector.broadcast %cst_18 : f32 to vector<1x4x2048xf32>
      %c0_19 = arith.constant 0 : index
      %c0_20 = arith.constant 0 : index
      %c0_21 = arith.constant 0 : index
      %36 = vector.load %arg5[%c0_19, %c0_20, %c0_21] : memref<1x4x2048xf32, #tpu.memory_space<vmem>>, vector<1x4x2048xf32>
      tpu.vector_store %arg5[%c0_19, %c0_20, %c0_21], %35 {strides = array<i32>} : memref<1x4x2048xf32, #tpu.memory_space<vmem>>, vector<1x4x2048xf32>,
    } else {
    }
    %c0_11 = arith.constant 0 : index
    %c0_12 = arith.constant 0 : index
    %c0_13 = arith.constant 0 : index
    %29 = vector.load %arg5[%c0_11, %c0_12, %c0_13] : memref<1x4x2048xf32, #tpu.memory_space<vmem>>, vector<1x4x2048xf32>
    %30 = arith.addf %29, %25 : vector<1x4x2048xf32>
    %c0_14 = arith.constant 0 : index
    %c0_15 = arith.constant 0 : index
    %c0_16 = arith.constant 0 : index
    %31 = vector.load %arg5[%c0_14, %c0_15, %c0_16] : memref<1x4x2048xf32, #tpu.memory_space<vmem>>, vector<1x4x2048xf32>
    tpu.vector_store %arg5[%c0_14, %c0_15, %c0_16], %30 {strides = array<i32>} : memref<1x4x2048xf32, #tpu.memory_space<vmem>>, vector<1x4x2048xf32>,
    %c1_i32 = arith.constant 1 : i32
    %32 = arith.cmpi eq, %arg1, %c1_i32 : i32
    %33 = arith.extui %32 : i1 to i32
    %c0_i32_17 = arith.constant 0 : i32
    %34 = arith.cmpi ne, %33, %c0_i32_17 : i32
    scf.if %34 {
      %cst_18 = arith.constant 0.000000e+00 : f32
      %35 = vector.broadcast %cst_18 : f32 to vector<1x1x1xf32>
      %c0_19 = arith.constant 0 : index
      %c0_20 = arith.constant 0 : index
      %c0_21 = arith.constant 0 : index
      %36 = vector.load %arg5[%c0_19, %c0_20, %c0_21] : memref<1x4x2048xf32, #tpu.memory_space<vmem>>, vector<1x4x2048xf32>
      %37 = vector.shape_cast %36 : vector<1x4x2048xf32> to vector<1x1x4x2048xf32>
      %cst_22 = arith.constant dense<0.000000e+00> : vector<1xf32>
      %38 = vector.multi_reduction <add>, %37, %cst_22 [1, 2, 3] : vector<1x1x4x2048xf32> to vector<1xf32>
      %39 = vector.shape_cast %38 : vector<1xf32> to vector<1x1x1x1xf32>
      %40 = vector.extract %39[0, 0, 0, 0] : f32 from vector<1x1x1x1xf32>
      %41 = vector.broadcast %40 : f32 to vector<1x1x1xf32>
      %42 = arith.addf %35, %41 : vector<1x1x1xf32>
      %c0_23 = arith.constant 0 : index
      %c0_24 = arith.constant 0 : index
      %c0_25 = arith.constant 0 : index
      %43 = vector.load %arg4[%c0_23, %c0_24, %c0_25] : memref<1x1x1xf32, #tpu.memory_space<vmem>>, vector<1x1x1xf32>
      tpu.vector_store %arg4[%c0_23, %c0_24, %c0_25], %42 {strides = array<i32>} : memref<1x1x1xf32, #tpu.memory_space<vmem>>, vector<1x1x1xf32>,
    } else {
    }
    return
  }
  func.func @transform_0(%arg0: i32, %arg1: i32) -> (i32, i32, i32) {
    %c0_i32 = arith.constant 0 : i32
    %c0_i32_0 = arith.constant 0 : i32
    return %arg0, %c0_i32, %arg1 : i32, i32, i32
  }
  func.func @transform_1(%arg0: i32, %arg1: i32) -> (i32, i32, i32) {
    %c0_i32 = arith.constant 0 : i32
    %c0_i32_0 = arith.constant 0 : i32
    return %arg0, %c0_i32, %arg1 : i32, i32, i32
  }
  func.func @transform_2(%arg0: i32, %arg1: i32) -> (i32, i32, i32) {
    %c0_i32 = arith.constant 0 : i32
    %c0_i32_0 = arith.constant 0 : i32
    %c0_i32_1 = arith.constant 0 : i32
    return %arg0, %c0_i32, %c0_i32_0 : i32, i32, i32
  }
}

</mosaic_0001>

<llo_original>
// kernel: tpu_custom_call.1
$region0: #{tpu_custom_call.1}
  #allocation0 [shape = 'u32[]', space=smem, size = 0x4, offset = 0x4, fixed_abs, tag = 'smem constant byte address 0x4 - core index']
  #allocation1 [shape = 'u32[72,128]{1,0:T(1,128)}', space=vmem, size = 0x9000, scoped, tag = 'internal scratch']
  #allocation2 [shape = 'f32[1,4,2048]{2,1,0:T(4,128)}', space=vmem, size = 0x8000, scoped, tag = 'scratch operand']
  %s0 = inlined_call_operand.hbm [shape: f32[2,4,4096], index: 0, kind: input, shape index: {}]
  %s1 = inlined_call_operand.hbm [shape: s32[2,1,4096], index: 1, kind: input, shape index: {}]
  %s2 = inlined_call_operand.vmem [shape: f32[2,1,1], index: 2, kind: output, shape index: {}]
  %s3 = sld [smem:[#allocation0]]
  $region57: #{tpu_custom_call.1} parent=0
    _
  %s5 = ssub.s32 1, %s3
  %s6 = scalar_select 0, %s5, %s3
  $region1: #{tpu_custom_call.1} parent=0
    #allocation3 [shape = 'u8[65536]{0}', space=vmem, size = 0x10000, scoped, tag = 'input window, operand 0']
    #allocation4 [shape = 's32[2]{0}', space=sflag, size = 0x8, scoped, tag = 'scoped memory for tpu_custom_call.1']
    #allocation5 [shape = 'u8[16384]{0}', space=vmem, size = 0x4000, scoped, tag = 'input window, operand 1']
    #allocation6 [shape = 's32[2]{0}', space=sflag, size = 0x8, scoped, tag = 'scoped memory for tpu_custom_call.1']
    %7 = vsyncpa [#allocation4], 0
    %s8 = scalar_lea.sflag [#allocation4], 1
    %9 = vsyncpa %s8, 0
    %10 = vsyncpa [#allocation6], 0
    %s11 = scalar_lea.sflag [#allocation6], 1
    %12 = vsyncpa %s11, 0
    loop: start=0, step=1, limit=6
    $region2: #{tpu_custom_call.1} parent=1 // loop_pre_header
      _
    $region3: #{tpu_custom_call.1} parent=1 // loop_header
      %s14 = sphi 0, %s18
      %p15 = scmp.ge.s32.totalorder %s14, 6
      %s21 = sphi 0, %s33
      %s22 = sphi 0, %s29
      %s23 = sphi 0, %s21
      %s24 = sphi 0, %s22
      %s25 = sphi 0, %s23
      %s26 = sphi 0, %s24
      %s38 = sphi 0, %s40
      %s41 = sphi 0, %s38
      %s42 = sphi 0, %s41
      %s58 = sphi 0, %s42
      %s66 = sphi 0, %s68
      %s69 = sphi 0, %s66
      %s70 = sphi 0, %s69
      %s86 = sphi 0, %s70
      %s92 = sphi 0, %s94
      %s95 = sphi 0, %s92
      %s96 = sphi 0, %s95
      %s112 = sphi 0, %s96
    $region4: #{tpu_custom_call.1} parent=1 // loop_header_branch
      %17 = sbr.rel (%p15) target = $region8
    $region5: #{tpu_custom_call.1} parent=1 // loop_body
      %s19 = ssub.s32 %s14, 1
      %s20 = ssub.s32 %s14, 2
      %s27 = sadd.s32 1, %s22
      %p28 = scmp.ge.s32.totalorder %s27, 2
      %s29 = scalar_select %p28, 0, %s27
      %s30 = sadd.s32 1, %s21
      %s31 = scalar_select %p28, %s30, %s21
      %p32 = scmp.ge.s32.totalorder %s31, 2
      %s33 = scalar_select %p32, 0, %s31
      %s34 = ssub.s32 %s21, %s33
      %s35 = ssub.s32 %s22, %s29
      %s36 = sor.u32 %s34, %s35
      %p37 = scmp.eq.s32.totalorder %s36, 0
      %s39 = sadd.s32 %s38, 1
      %s40 = scalar_select %p37, %s38, %s39
      %p43 = pneg %p37
      %p44 = scmp.eq.s32.totalorder %s14, 3
      %p45 = por %p43, %p44
      %p46 = scmp.ne.s32.totalorder %s38, %s41
      %p47 = scmp.eq.s32.totalorder %s14, 0
      %p48 = por %p46, %p47
      %p49 = scmp.ne.s32.totalorder %s38, %s41
      %p50 = scmp.eq.s32.totalorder %s19, 3
      %p51 = por %p49, %p50
      %p52 = scmp.ne.s32.totalorder %s41, %s42
      %p53 = scmp.eq.s32.totalorder %s19, 0
      %p54 = por %p52, %p53
      %p55 = scmp.ne.s32.totalorder %s41, %s42
      %p56 = scmp.eq.s32.totalorder %s20, 3
      %p57 = por %p55, %p56
      %p59 = scmp.ne.s32.totalorder %s42, %s58
      %p60 = scmp.eq.s32.totalorder %s20, 0
      %p61 = por %p59, %p60
      %s62 = ssub.s32 %s21, %s33
      %s63 = ssub.s32 %s22, %s29
      %s64 = sor.u32 %s62, %s63
      %p65 = scmp.eq.s32.totalorder %s64, 0
      %s67 = sadd.s32 %s66, 1
      %s68 = scalar_select %p65, %s66, %s67
      %p71 = pneg %p65
      %p72 = scmp.eq.s32.totalorder %s14, 3
      %p73 = por %p71, %p72
      %p74 = scmp.ne.s32.totalorder %s66, %s69
      %p75 = scmp.eq.s32.totalorder %s14, 0
      %p76 = por %p74, %p75
      %p77 = scmp.ne.s32.totalorder %s66, %s69
      %p78 = scmp.eq.s32.totalorder %s19, 3
      %p79 = por %p77, %p78
      %p80 = scmp.ne.s32.totalorder %s69, %s70
      %p81 = scmp.eq.s32.totalorder %s19, 0
      %p82 = por %p80, %p81
      %p83 = scmp.ne.s32.totalorder %s69, %s70
      %p84 = scmp.eq.s32.totalorder %s20, 3
      %p85 = por %p83, %p84
      %p87 = scmp.ne.s32.totalorder %s70, %s86
      %p88 = scmp.eq.s32.totalorder %s20, 0
      %p89 = por %p87, %p88
      %s90 = ssub.s32 %s21, %s33
      %p91 = scmp.eq.s32.totalorder %s90, 0
      %s93 = sadd.s32 %s92, 1
      %s94 = scalar_select %p91, %s92, %s93
      %p97 = pneg %p91
      %p98 = scmp.eq.s32.totalorder %s14, 3
      %p99 = por %p97, %p98
      %p100 = scmp.ne.s32.totalorder %s92, %s95
      %p101 = scmp.eq.s32.totalorder %s14, 0
      %p102 = por %p100, %p101
      %p103 = scmp.ne.s32.totalorder %s92, %s95
      %p104 = scmp.eq.s32.totalorder %s19, 3
      %p105 = por %p103, %p104
      %p106 = scmp.ne.s32.totalorder %s95, %s96
      %p107 = scmp.eq.s32.totalorder %s19, 0
      %p108 = por %p106, %p107
      %p109 = scmp.ne.s32.totalorder %s95, %s96
      %p110 = scmp.eq.s32.totalorder %s20, 3
      %p111 = por %p109, %p110
      %p113 = scmp.ne.s32.totalorder %s96, %s112
      %p114 = scmp.eq.s32.totalorder %s20, 0
      %p115 = por %p113, %p114
      %p116 = scmp.le.s32.totalorder 1, %s14
      %p117 = scmp.lt.s32.totalorder %s14, 5
      %p118 = pnand %p116, %p117
      %p119 = pneg %p118
      // Predicated region
      $region9: #{tpu_custom_call.1} parent=5 // pred_check
        _
      $region10: #{tpu_custom_call.1} parent=5 // pred_check_branch
        %121 = sbr.rel (%p118) target = $region12
      $region11: #{tpu_custom_call.1} parent=5 // pred_region
        %s122 = ssub.s32 %s14, 1
      $region12: #{tpu_custom_call.1} parent=5 // pred_fallthru
        _
      %p123 = scmp.lt.s32.totalorder %s14, 4
      // Predicated region
      $region13: #{tpu_custom_call.1} parent=5 // pred_check
        %p124 = pneg %p123
      $region14: #{tpu_custom_call.1} parent=5 // pred_check_branch
        %126 = sbr.rel (%p124) target = $region16
      $region15: #{tpu_custom_call.1} parent=5 // pred_region
        // Predicated region
        $region17: #{tpu_custom_call.1} parent=15 // pred_check
          %p127 = pneg %p48
        $region18: #{tpu_custom_call.1} parent=15 // pred_check_branch
          %129 = sbr.rel (%p127) target = $region20
        $region19: #{tpu_custom_call.1} parent=15 // pred_region
          %s130 = sand.u32 %s38, 1
          %s131 = scalar_lea.sflag [#allocation4], %s130
          %s132 = sand.u32 %s38, 1
          %s133 = smul.addr %s132, 64
          %s134 = scalar_lea.vmem [#allocation3], %s133
          %s135 = smul.u32 16, %s22
          %137 = vsyncadd %s131, 0
          %s138 = smul.addr %s21, 32
          %s139 = sadd.s32 %s135, %s138
          %s140 = smul.addr %s139, 4
          %s141 = scalar_lea.hbm %s0, %s140
          %s143 = sshll.u32 %s141, 4
          %s144 = int_to_ptr.hbm [resolvable:$true] %s143
          %s145 = sshll.u32 %s134, 4
          %s146 = int_to_ptr.vmem [resolvable:$true] %s145
          %148 = dma.hbm_to_vmem [thread:$0]  %s144, 1024, %s146, %s131
        $region20: #{tpu_custom_call.1} parent=15 // pred_fallthru
          _
        // Predicated region
        $region21: #{tpu_custom_call.1} parent=15 // pred_check
          %p149 = pneg %p76
        $region22: #{tpu_custom_call.1} parent=15 // pred_check_branch
          %151 = sbr.rel (%p149) target = $region24
        $region23: #{tpu_custom_call.1} parent=15 // pred_region
          %s152 = sand.u32 %s66, 1
          %s153 = scalar_lea.sflag [#allocation6], %s152
          %s154 = sand.u32 %s66, 1
          %s155 = smul.addr %s154, 16
          %s156 = scalar_lea.vmem [#allocation5], %s155
          %s157 = smul.u32 16, %s22
          %159 = vsyncadd %s153, 0
          %s160 = smul.addr %s21, 32
          %s161 = sadd.s32 %s157, %s160
          %s162 = scalar_lea.hbm %s1, %s161
          %s164 = sshll.u32 %s162, 4
          %s165 = int_to_ptr.hbm [resolvable:$true] %s164
          %s166 = sshll.u32 %s156, 4
          %s167 = int_to_ptr.vmem [resolvable:$true] %s166
          %169 = dma.hbm_to_vmem [thread:$0]  %s165, 256, %s167, %s153
        $region24: #{tpu_custom_call.1} parent=15 // pred_fallthru
          _
      $region16: #{tpu_custom_call.1} parent=5 // pred_fallthru
        _
      %p170 = scmp.le.s32.totalorder 1, %s14
      %p171 = scmp.lt.s32.totalorder %s14, 5
      %p172 = pnand %p170, %p171
      %p173 = pneg %p172
      // Predicated region
      $region25: #{tpu_custom_call.1} parent=5 // pred_check
        _
      $region26: #{tpu_custom_call.1} parent=5 // pred_check_branch
        %175 = sbr.rel (%p172) target = $region28
      $region27: #{tpu_custom_call.1} parent=5 // pred_region
        %s176 = ssub.s32 %s14, 1
        %s177 = sand.u32 %s41, 1
        %s178 = scalar_lea.sflag [#allocation4], %s177
        %s179 = sand.u32 %s41, 1
        %s180 = smul.addr %s179, 64
        %s181 = scalar_lea.vmem [#allocation3], %s180
        // Predicated region
        $region29: #{tpu_custom_call.1} parent=27 // pred_check
          %p182 = pneg %p54
        $region30: #{tpu_custom_call.1} parent=27 // pred_check_branch
          %184 = sbr.rel (%p182) target = $region32
        $region31: #{tpu_custom_call.1} parent=27 // pred_region
          %186 = dma.done %s178, 1024
        $region32: #{tpu_custom_call.1} parent=27 // pred_fallthru
          _
        %s187 = sand.u32 %s69, 1
        %s188 = scalar_lea.sflag [#allocation6], %s187
        %s189 = sand.u32 %s69, 1
        %s190 = smul.addr %s189, 16
        %s191 = scalar_lea.vmem [#allocation5], %s190
        // Predicated region
        $region33: #{tpu_custom_call.1} parent=27 // pred_check
          %p192 = pneg %p82
        $region34: #{tpu_custom_call.1} parent=27 // pred_check_branch
          %194 = sbr.rel (%p192) target = $region36
        $region35: #{tpu_custom_call.1} parent=27 // pred_region
          %196 = dma.done %s188, 256
        $region36: #{tpu_custom_call.1} parent=27 // pred_fallthru
          _
        %s197 = sand.u32 %s41, 1
        %s198 = scalar_lea.sflag [#allocation4], %s197
        %s199 = sand.u32 %s41, 1
        %s200 = smul.addr %s199, 64
        %s201 = scalar_lea.vmem [#allocation3], %s200
        %p202 = pneg %p54
        %p203 = pneg %p51
        %s204 = sand.u32 %s69, 1
        %s205 = scalar_lea.sflag [#allocation6], %s204
        %s206 = sand.u32 %s69, 1
        %s207 = smul.addr %s206, 16
        %s208 = scalar_lea.vmem [#allocation5], %s207
        %p209 = pneg %p82
        %p210 = pneg %p79
        %p211 = pneg %p108
        %p212 = pneg %p105
        %p213 = scmp.lt.s32.totalorder %s23, 1
        %s214 = scalar_select %p213, %s23, 1
        %s215 = scalar_lea.vmem %s2, %s214
        %s216 = smul.u32 16, %s24
        %s217 = smul.u32 16, %s24
        %p218 = scmp.lt.s32.totalorder %s23, 1
        %s219 = scalar_select %p218, %s23, 1
        %s220 = scalar_lea.vmem %s2, %s219
        %v221 = vld [vmem:[%s181] sm:$0xff]
        %v222 = vld [vmem:[%s181 + $0x8] sm:$0xff]
        %v223 = vld [vmem:[%s181 + $0x10] sm:$0xff]
        %v224 = vld [vmem:[%s181 + $0x18] sm:$0xff]
        %v225 = vld [vmem:[%s181 + $0x20] sm:$0xff]
        %v226 = vld [vmem:[%s181 + $0x28] sm:$0xff]
        %v227 = vld [vmem:[%s181 + $0x30] sm:$0xff]
        %v228 = vld [vmem:[%s181 + $0x38] sm:$0xff]
        %v229 = vld [vmem:[%s191] sm:$0xff]
        %v230 = vld [vmem:[%s191 + $0x8] sm:$0xff]
        %vm231 = vcmp.lt.s32.totalorder %v229, 0
        %vm232 = vcmp.lt.s32.totalorder %v230, 0
        %v233 = vsub.s32 0, %v229
        %v234 = vsub.s32 0, %v230
        %v235 = vsel %vm231, %v233, %v229
        %v236 = vsel %vm232, %v234, %v230
        %v237 = vlaneseq
        %v238 = vshrl.u32 %v237, 7
        %v239 = vperm.slane %v235, 0
        %v240 = vperm.slane %v235, 1
        %v241 = vperm.slane %v235, 2
        %v242 = vperm.slane %v235, 3
        %v243 = vperm.slane %v235, 4
        %v244 = vperm.slane %v235, 5
        %v245 = vperm.slane %v235, 6
        %v246 = vperm.slane %v235, 7
        %v247 = vperm.slane %v236, 0
        %v248 = vperm.slane %v236, 1
        %v249 = vperm.slane %v236, 2
        %v250 = vperm.slane %v236, 3
        %v251 = vperm.slane %v236, 4
        %v252 = vperm.slane %v236, 5
        %v253 = vperm.slane %v236, 6
        %v254 = vperm.slane %v236, 7
        %vm255 = vcmp.eq.s32.totalorder %v239, %v238
        %vm256 = vcmp.eq.s32.totalorder %v240, %v238
        %vm257 = vcmp.eq.s32.totalorder %v241, %v238
        %vm258 = vcmp.eq.s32.totalorder %v242, %v238
        %vm259 = vcmp.eq.s32.totalorder %v243, %v238
        %vm260 = vcmp.eq.s32.totalorder %v244, %v238
        %vm261 = vcmp.eq.s32.totalorder %v245, %v238
        %vm262 = vcmp.eq.s32.totalorder %v246, %v238
        %vm263 = vcmp.eq.s32.totalorder %v247, %v238
        %vm264 = vcmp.eq.s32.totalorder %v248, %v238
        %vm265 = vcmp.eq.s32.totalorder %v249, %v238
        %vm266 = vcmp.eq.s32.totalorder %v250, %v238
        %vm267 = vcmp.eq.s32.totalorder %v251, %v238
        %vm268 = vcmp.eq.s32.totalorder %v252, %v238
        %vm269 = vcmp.eq.s32.totalorder %v253, %v238
        %vm270 = vcmp.eq.s32.totalorder %v254, %v238
        %v271 = vmax.f32 %v221, 0.0
        %v272 = vmax.f32 %v222, 0.0
        %v273 = vmax.f32 %v223, 0.0
        %v274 = vmax.f32 %v224, 0.0
        %v275 = vmax.f32 %v225, 0.0
        %v276 = vmax.f32 %v226, 0.0
        %v277 = vmax.f32 %v227, 0.0
        %v278 = vmax.f32 %v228, 0.0
        %287 = vst [vmem:[#allocation1] ss:$2 sm:$0xff] %v221
        %s288 = scalar_lea.vmem [#allocation1], 16
        %289 = vst [vmem:[%s288] ss:$2 sm:$0xff] %v222
        %s290 = scalar_lea.vmem [#allocation1], 32
        %291 = vst [vmem:[%s290] ss:$2 sm:$0xff] %v223
        %s292 = scalar_lea.vmem [#allocation1], 48
        %293 = vst [vmem:[%s292] ss:$2 sm:$0xff] %v224
        %v294 = vld.sshfl [vmem:[#allocation1] sm:$0xff pattern:$0x75316420]
        %v295 = vld.sshfl [vmem:[#allocation1 + $0x8] sm:$0xff pattern:$0x75316420]
        %v296 = vld.sshfl [vmem:[#allocation1 + $0x10] sm:$0xff pattern:$0x75316420]
        %v297 = vld.sshfl [vmem:[#allocation1 + $0x18] sm:$0xff pattern:$0x75316420]
        %v298 = vld.sshfl [vmem:[#allocation1 + $0x20] sm:$0xff pattern:$0x75316420]
        %v299 = vld.sshfl [vmem:[#allocation1 + $0x28] sm:$0xff pattern:$0x75316420]
        %v300 = vld.sshfl [vmem:[#allocation1 + $0x30] sm:$0xff pattern:$0x75316420]
        %v301 = vld.sshfl [vmem:[#allocation1 + $0x38] sm:$0xff pattern:$0x75316420]
        %302 = vst [vmem:[#allocation1] ss:$2 sm:$0xff] %v225
        %303 = vst [vmem:[%s288] ss:$2 sm:$0xff] %v226
        %304 = vst [vmem:[%s290] ss:$2 sm:$0xff] %v227
        %305 = vst [vmem:[%s292] ss:$2 sm:$0xff] %v228
        %v306 = vld.sshfl [vmem:[#allocation1] sm:$0xff pattern:$0x75316420]
        %v307 = vld.sshfl [vmem:[#allocation1 + $0x8] sm:$0xff pattern:$0x75316420]
        %v308 = vld.sshfl [vmem:[#allocation1 + $0x10] sm:$0xff pattern:$0x75316420]
        %v309 = vld.sshfl [vmem:[#allocation1 + $0x18] sm:$0xff pattern:$0x75316420]
        %v310 = vld.sshfl [vmem:[#allocation1 + $0x20] sm:$0xff pattern:$0x75316420]
        %v311 = vld.sshfl [vmem:[#allocation1 + $0x28] sm:$0xff pattern:$0x75316420]
        %v312 = vld.sshfl [vmem:[#allocation1 + $0x30] sm:$0xff pattern:$0x75316420]
        %v313 = vld.sshfl [vmem:[#allocation1 + $0x38] sm:$0xff pattern:$0x75316420]
        %v330 = vsel %vm255, %v294, 0.0
        %v331 = vsel %vm256, %v295, 0.0
        %v332 = vsel %vm257, %v296, 0.0
        %v333 = vsel %vm258, %v297, 0.0
        %v334 = vsel %vm259, %v298, 0.0
        %v335 = vsel %vm260, %v299, 0.0
        %v336 = vsel %vm261, %v300, 0.0
        %v337 = vsel %vm262, %v301, 0.0
        %v338 = vsel %vm263, %v306, 0.0
        %v339 = vsel %vm264, %v307, 0.0
        %v340 = vsel %vm265, %v308, 0.0
        %v341 = vsel %vm266, %v309, 0.0
        %v342 = vsel %vm267, %v310, 0.0
        %v343 = vsel %vm268, %v311, 0.0
        %v344 = vsel %vm269, %v312, 0.0
        %v345 = vsel %vm270, %v313, 0.0
        %v362 = vrot.slane %v331, 4
        %v363 = vrot.slane %v333, 4
        %v364 = vrot.slane %v335, 4
        %v365 = vrot.slane %v337, 4
        %v366 = vrot.slane %v339, 4
        %v367 = vrot.slane %v341, 4
        %v368 = vrot.slane %v343, 4
        %v369 = vrot.slane %v345, 4
        %vm370 = vcmask 1043456
        %v371 = vsel %vm370, %v330, %v362
        %v372 = vsel %vm370, %v332, %v363
        %v373 = vsel %vm370, %v334, %v364
        %v374 = vsel %vm370, %v336, %v365
        %v375 = vsel %vm370, %v338, %v366
        %v376 = vsel %vm370, %v340, %v367
        %v377 = vsel %vm370, %v342, %v368
        %v378 = vsel %vm370, %v344, %v369
        %v387 = vsub.f32 %v271, %v371
        %v388 = vsub.f32 %v272, %v372
        %v389 = vsub.f32 %v273, %v373
        %v390 = vsub.f32 %v274, %v374
        %v391 = vsub.f32 %v275, %v375
        %v392 = vsub.f32 %v276, %v376
        %v393 = vsub.f32 %v277, %v377
        %v394 = vsub.f32 %v278, %v378
        %v395 = vand.u32 2147483647, %v221
        %v396 = vand.u32 2147483647, %v222
        %v397 = vand.u32 2147483647, %v223
        %v398 = vand.u32 2147483647, %v224
        %v399 = vand.u32 2147483647, %v225
        %v400 = vand.u32 2147483647, %v226
        %v401 = vand.u32 2147483647, %v227
        %v402 = vand.u32 2147483647, %v228
        %v403 = vsub.f32 0.0, %v395
        %v404 = vsub.f32 0.0, %v396
        %v405 = vsub.f32 0.0, %v397
        %v406 = vsub.f32 0.0, %v398
        %v407 = vsub.f32 0.0, %v399
        %v408 = vsub.f32 0.0, %v400
        %v409 = vsub.f32 0.0, %v401
        %v410 = vsub.f32 0.0, %v402
        %v411 = vmul.f32 %v403, 1.442695
        %v412 = vpow.pop %v411
        %v413 = vmul.f32 %v404, 1.442695
        %v414 = vpow.pop %v413
        %v415 = vmul.f32 %v405, 1.442695
        %v416 = vpow.pop %v415
        %v417 = vmul.f32 %v406, 1.442695
        %v418 = vpow.pop %v417
        %v419 = vmul.f32 %v407, 1.442695
        %v420 = vpow.pop %v419
        %v421 = vmul.f32 %v408, 1.442695
        %v422 = vpow.pop %v421
        %v423 = vmul.f32 %v409, 1.442695
        %v424 = vpow.pop %v423
        %v425 = vmul.f32 %v410, 1.442695
        %v426 = vpow.pop %v425
        %v427 = vadd.f32 %v412, 1.0
        %v428 = vlog2.pop %v427
        %v429 = vmul.f32 %v428, 0.6931472
        %v430 = vmul.f32 -0.5, %v412
        %v431 = vadd.f32 %v430, 1.0
        %v432 = vmul.f32 %v431, %v412
        %v433 = vand.u32 2147483647, %v412
        %vm434 = vcmp.lt.f32.partialorder %v433, 0.0004427343
        %v435 = vsel %vm434, %v432, %v429
        %v436 = vadd.f32 %v414, 1.0
        %v437 = vlog2.pop %v436
        %v438 = vmul.f32 %v437, 0.6931472
        %v439 = vmul.f32 -0.5, %v414
        %v440 = vadd.f32 %v439, 1.0
        %v441 = vmul.f32 %v440, %v414
        %v442 = vand.u32 2147483647, %v414
        %vm443 = vcmp.lt.f32.partialorder %v442, 0.0004427343
        %v444 = vsel %vm443, %v441, %v438
        %v445 = vadd.f32 %v416, 1.0
        %v446 = vlog2.pop %v445
        %v447 = vmul.f32 %v446, 0.6931472
        %v448 = vmul.f32 -0.5, %v416
        %v449 = vadd.f32 %v448, 1.0
        %v450 = vmul.f32 %v449, %v416
        %v451 = vand.u32 2147483647, %v416
        %vm452 = vcmp.lt.f32.partialorder %v451, 0.0004427343
        %v453 = vsel %vm452, %v450, %v447
        %v454 = vadd.f32 %v418, 1.0
        %v455 = vlog2.pop %v454
        %v456 = vmul.f32 %v455, 0.6931472
        %v457 = vmul.f32 -0.5, %v418
        %v458 = vadd.f32 %v457, 1.0
        %v459 = vmul.f32 %v458, %v418
        %v460 = vand.u32 2147483647, %v418
        %vm461 = vcmp.lt.f32.partialorder %v460, 0.0004427343
        %v462 = vsel %vm461, %v459, %v456
        %v463 = vadd.f32 %v420, 1.0
        %v464 = vlog2.pop %v463
        %v465 = vmul.f32 %v464, 0.6931472
        %v466 = vmul.f32 -0.5, %v420
        %v467 = vadd.f32 %v466, 1.0
        %v468 = vmul.f32 %v467, %v420
        %v469 = vand.u32 2147483647, %v420
        %vm470 = vcmp.lt.f32.partialorder %v469, 0.0004427343
        %v471 = vsel %vm470, %v468, %v465
        %v472 = vadd.f32 %v422, 1.0
        %v473 = vlog2.pop %v472
        %v474 = vmul.f32 %v473, 0.6931472
        %v475 = vmul.f32 -0.5, %v422
        %v476 = vadd.f32 %v475, 1.0
        %v477 = vmul.f32 %v476, %v422
        %v478 = vand.u32 2147483647, %v422
        %vm479 = vcmp.lt.f32.partialorder %v478, 0.0004427343
        %v480 = vsel %vm479, %v477, %v474
        %v481 = vadd.f32 %v424, 1.0
        %v482 = vlog2.pop %v481
        %v483 = vmul.f32 %v482, 0.6931472
        %v484 = vmul.f32 -0.5, %v424
        %v485 = vadd.f32 %v484, 1.0
        %v486 = vmul.f32 %v485, %v424
        %v487 = vand.u32 2147483647, %v424
        %vm488 = vcmp.lt.f32.partialorder %v487, 0.0004427343
        %v489 = vsel %vm488, %v486, %v483
        %v490 = vadd.f32 %v426, 1.0
        %v491 = vlog2.pop %v490
        %v492 = vmul.f32 %v491, 0.6931472
        %v493 = vmul.f32 -0.5, %v426
        %v494 = vadd.f32 %v493, 1.0
        %v495 = vmul.f32 %v494, %v426
        %v496 = vand.u32 2147483647, %v426
        %vm497 = vcmp.lt.f32.partialorder %v496, 0.0004427343
        %v498 = vsel %vm497, %v495, %v492
        %v499 = vadd.f32 %v387, %v435
        %v500 = vadd.f32 %v388, %v444
        %v501 = vadd.f32 %v389, %v453
        %v502 = vadd.f32 %v390, %v462
        %v503 = vadd.f32 %v391, %v471
        %v504 = vadd.f32 %v392, %v480
        %v505 = vadd.f32 %v393, %v489
        %v506 = vadd.f32 %v394, %v498
        %v507 = vsel %vm231, 1, 0
        %v508 = vsel %vm232, 1, 0
        %v509 = vperm.slane %v507, 0
        %v510 = vperm.slane %v507, 1
        %v511 = vperm.slane %v507, 2
        %v512 = vperm.slane %v507, 3
        %v513 = vperm.slane %v507, 4
        %v514 = vperm.slane %v507, 5
        %v515 = vperm.slane %v507, 6
        %v516 = vperm.slane %v507, 7
        %v517 = vperm.slane %v508, 0
        %v518 = vperm.slane %v508, 1
        %v519 = vperm.slane %v508, 2
        %v520 = vperm.slane %v508, 3
        %v521 = vperm.slane %v508, 4
        %v522 = vperm.slane %v508, 5
        %v523 = vperm.slane %v508, 6
        %v524 = vperm.slane %v508, 7
        %vm525 = vcmp.eq.s32.totalorder %v509, 1
        %vm526 = vcmp.eq.s32.totalorder %v510, 1
        %vm527 = vcmp.eq.s32.totalorder %v511, 1
        %vm528 = vcmp.eq.s32.totalorder %v512, 1
        %vm529 = vcmp.eq.s32.totalorder %v513, 1
        %vm530 = vcmp.eq.s32.totalorder %v514, 1
        %vm531 = vcmp.eq.s32.totalorder %v515, 1
        %vm532 = vcmp.eq.s32.totalorder %v516, 1
        %vm533 = vcmp.eq.s32.totalorder %v517, 1
        %vm534 = vcmp.eq.s32.totalorder %v518, 1
        %vm535 = vcmp.eq.s32.totalorder %v519, 1
        %vm536 = vcmp.eq.s32.totalorder %v520, 1
        %vm537 = vcmp.eq.s32.totalorder %v521, 1
        %vm538 = vcmp.eq.s32.totalorder %v522, 1
        %vm539 = vcmp.eq.s32.totalorder %v523, 1
        %vm540 = vcmp.eq.s32.totalorder %v524, 1
        %549 = vst [vmem:[#allocation1] ss:$2 sm:$0xff] %v499
        %s550 = scalar_lea.vmem [#allocation1], 16
        %551 = vst [vmem:[%s550] ss:$2 sm:$0xff] %v500
        %s552 = scalar_lea.vmem [#allocation1], 32
        %553 = vst [vmem:[%s552] ss:$2 sm:$0xff] %v501
        %s554 = scalar_lea.vmem [#allocation1], 48
        %555 = vst [vmem:[%s554] ss:$2 sm:$0xff] %v502
        %v556 = vld.sshfl [vmem:[#allocation1] sm:$0xff pattern:$0x75316420]
        %v557 = vld.sshfl [vmem:[#allocation1 + $0x8] sm:$0xff pattern:$0x75316420]
        %v558 = vld.sshfl [vmem:[#allocation1 + $0x10] sm:$0xff pattern:$0x75316420]
        %v559 = vld.sshfl [vmem:[#allocation1 + $0x18] sm:$0xff pattern:$0x75316420]
        %v560 = vld.sshfl [vmem:[#allocation1 + $0x20] sm:$0xff pattern:$0x75316420]
        %v561 = vld.sshfl [vmem:[#allocation1 + $0x28] sm:$0xff pattern:$0x75316420]
        %v562 = vld.sshfl [vmem:[#allocation1 + $0x30] sm:$0xff pattern:$0x75316420]
        %v563 = vld.sshfl [vmem:[#allocation1 + $0x38] sm:$0xff pattern:$0x75316420]
        %564 = vst [vmem:[#allocation1] ss:$2 sm:$0xff] %v503
        %565 = vst [vmem:[%s550] ss:$2 sm:$0xff] %v504
        %566 = vst [vmem:[%s552] ss:$2 sm:$0xff] %v505
        %567 = vst [vmem:[%s554] ss:$2 sm:$0xff] %v506
        %v568 = vld.sshfl [vmem:[#allocation1] sm:$0xff pattern:$0x75316420]
        %v569 = vld.sshfl [vmem:[#allocation1 + $0x8] sm:$0xff pattern:$0x75316420]
        %v570 = vld.sshfl [vmem:[#allocation1 + $0x10] sm:$0xff pattern:$0x75316420]
        %v571 = vld.sshfl [vmem:[#allocation1 + $0x18] sm:$0xff pattern:$0x75316420]
        %v572 = vld.sshfl [vmem:[#allocation1 + $0x20] sm:$0xff pattern:$0x75316420]
        %v573 = vld.sshfl [vmem:[#allocation1 + $0x28] sm:$0xff pattern:$0x75316420]
        %v574 = vld.sshfl [vmem:[#allocation1 + $0x30] sm:$0xff pattern:$0x75316420]
        %v575 = vld.sshfl [vmem:[#allocation1 + $0x38] sm:$0xff pattern:$0x75316420]
        %v592 = vsel %vm525, 0.0, %v556
        %v593 = vsel %vm526, 0.0, %v557
        %v594 = vsel %vm527, 0.0, %v558
        %v595 = vsel %vm528, 0.0, %v559
        %v596 = vsel %vm529, 0.0, %v560
        %v597 = vsel %vm530, 0.0, %v561
        %v598 = vsel %vm531, 0.0, %v562
        %v599 = vsel %vm532, 0.0, %v563
        %v600 = vsel %vm533, 0.0, %v568
        %v601 = vsel %vm534, 0.0, %v569
        %v602 = vsel %vm535, 0.0, %v570
        %v603 = vsel %vm536, 0.0, %v571
        %v604 = vsel %vm537, 0.0, %v572
        %v605 = vsel %vm538, 0.0, %v573
        %v606 = vsel %vm539, 0.0, %v574
        %v607 = vsel %vm540, 0.0, %v575
        %p608 = scmp.eq.s32.totalorder %s24, 0
        // Predicated region
        $region37: #{tpu_custom_call.1} parent=27 // pred_check
          %p609 = pneg %p608
        $region38: #{tpu_custom_call.1} parent=27 // pred_check_branch
          %611 = sbr.rel (%p609) target = $region40
        $region39: #{tpu_custom_call.1} parent=27 // pred_region
          %612 = vst [vmem:[#allocation2] sm:$0xff] 0.0
          %613 = vst [vmem:[#allocation2 + $0x8] sm:$0xff] 0.0
          %614 = vst [vmem:[#allocation2 + $0x10] sm:$0xff] 0.0
          %615 = vst [vmem:[#allocation2 + $0x18] sm:$0xff] 0.0
          %616 = vst [vmem:[#allocation2 + $0x20] sm:$0xff] 0.0
          %617 = vst [vmem:[#allocation2 + $0x28] sm:$0xff] 0.0
          %618 = vst [vmem:[#allocation2 + $0x30] sm:$0xff] 0.0
          %619 = vst [vmem:[#allocation2 + $0x38] sm:$0xff] 0.0
        $region40: #{tpu_custom_call.1} parent=27 // pred_fallthru
          _
        %v620 = vld [vmem:[#allocation2] sm:$0xff]
        %v621 = vld [vmem:[#allocation2 + $0x8] sm:$0xff]
        %v622 = vld [vmem:[#allocation2 + $0x10] sm:$0xff]
        %v623 = vld [vmem:[#allocation2 + $0x18] sm:$0xff]
        %v624 = vld [vmem:[#allocation2 + $0x20] sm:$0xff]
        %v625 = vld [vmem:[#allocation2 + $0x28] sm:$0xff]
        %v626 = vld [vmem:[#allocation2 + $0x30] sm:$0xff]
        %v627 = vld [vmem:[#allocation2 + $0x38] sm:$0xff]
        %v644 = vrot.slane %v593, 4
        %v645 = vrot.slane %v595, 4
        %v646 = vrot.slane %v597, 4
        %v647 = vrot.slane %v599, 4
        %v648 = vrot.slane %v601, 4
        %v649 = vrot.slane %v603, 4
        %v650 = vrot.slane %v605, 4
        %v651 = vrot.slane %v607, 4
        %v652 = vsel %vm370, %v592, %v644
        %v653 = vsel %vm370, %v594, %v645
        %v654 = vsel %vm370, %v596, %v646
        %v655 = vsel %vm370, %v598, %v647
        %v656 = vsel %vm370, %v600, %v648
        %v657 = vsel %vm370, %v602, %v649
        %v658 = vsel %vm370, %v604, %v650
        %v659 = vsel %vm370, %v606, %v651
        %v668 = vadd.f32 %v620, %v652
        %v669 = vadd.f32 %v621, %v653
        %v670 = vadd.f32 %v622, %v654
        %v671 = vadd.f32 %v623, %v655
        %v672 = vadd.f32 %v624, %v656
        %v673 = vadd.f32 %v625, %v657
        %v674 = vadd.f32 %v626, %v658
        %v675 = vadd.f32 %v627, %v659
        %676 = vst [vmem:[#allocation2] sm:$0xff] %v668
        %677 = vst [vmem:[#allocation2 + $0x8] sm:$0xff] %v669
        %678 = vst [vmem:[#allocation2 + $0x10] sm:$0xff] %v670
        %679 = vst [vmem:[#allocation2 + $0x18] sm:$0xff] %v671
        %680 = vst [vmem:[#allocation2 + $0x20] sm:$0xff] %v672
        %681 = vst [vmem:[#allocation2 + $0x28] sm:$0xff] %v673
        %682 = vst [vmem:[#allocation2 + $0x30] sm:$0xff] %v674
        %683 = vst [vmem:[#allocation2 + $0x38] sm:$0xff] %v675
        %p684 = scmp.eq.s32.totalorder %s24, 1
        // Predicated region
        $region41: #{tpu_custom_call.1} parent=27 // pred_check
          %p685 = pneg %p684
        $region42: #{tpu_custom_call.1} parent=27 // pred_check_branch
          %687 = sbr.rel (%p685) target = $region44
        $region43: #{tpu_custom_call.1} parent=27 // pred_region
          %v688 = vld [vmem:[#allocation2] sm:$0xff]
          %v689 = vld [vmem:[#allocation2 + $0x8] sm:$0xff]
          %v690 = vld [vmem:[#allocation2 + $0x10] sm:$0xff]
          %v691 = vld [vmem:[#allocation2 + $0x18] sm:$0xff]
          %v692 = vld [vmem:[#allocation2 + $0x20] sm:$0xff]
          %v693 = vld [vmem:[#allocation2 + $0x28] sm:$0xff]
          %v694 = vld [vmem:[#allocation2 + $0x30] sm:$0xff]
          %v695 = vld [vmem:[#allocation2 + $0x38] sm:$0xff]
          %704 = vst [vmem:[#allocation1] ss:$2 sm:$0xff] %v688
          %s705 = scalar_lea.vmem [#allocation1], 16
          %706 = vst [vmem:[%s705] ss:$2 sm:$0xff] %v689
          %s707 = scalar_lea.vmem [#allocation1], 32
          %708 = vst [vmem:[%s707] ss:$2 sm:$0xff] %v690
          %s709 = scalar_lea.vmem [#allocation1], 48
          %710 = vst [vmem:[%s709] ss:$2 sm:$0xff] %v691
          %v711 = vld.sshfl [vmem:[#allocation1] sm:$0xff pattern:$0x75316420]
          %v712 = vld.sshfl [vmem:[#allocation1 + $0x8] sm:$0xff pattern:$0x75316420]
          %v713 = vld.sshfl [vmem:[#allocation1 + $0x10] sm:$0xff pattern:$0x75316420]
          %v714 = vld.sshfl [vmem:[#allocation1 + $0x18] sm:$0xff pattern:$0x75316420]
          %v715 = vld.sshfl [vmem:[#allocation1 + $0x20] sm:$0xff pattern:$0x75316420]
          %v716 = vld.sshfl [vmem:[#allocation1 + $0x28] sm:$0xff pattern:$0x75316420]
          %v717 = vld.sshfl [vmem:[#allocation1 + $0x30] sm:$0xff pattern:$0x75316420]
          %v718 = vld.sshfl [vmem:[#allocation1 + $0x38] sm:$0xff pattern:$0x75316420]
          %719 = vst [vmem:[#allocation1] ss:$2 sm:$0xff] %v692
          %720 = vst [vmem:[%s705] ss:$2 sm:$0xff] %v693
          %721 = vst [vmem:[%s707] ss:$2 sm:$0xff] %v694
          %722 = vst [vmem:[%s709] ss:$2 sm:$0xff] %v695
          %v723 = vld.sshfl [vmem:[#allocation1] sm:$0xff pattern:$0x75316420]
          %v724 = vld.sshfl [vmem:[#allocation1 + $0x8] sm:$0xff pattern:$0x75316420]
          %v725 = vld.sshfl [vmem:[#allocation1 + $0x10] sm:$0xff pattern:$0x75316420]
          %v726 = vld.sshfl [vmem:[#allocation1 + $0x18] sm:$0xff pattern:$0x75316420]
          %v727 = vld.sshfl [vmem:[#allocation1 + $0x20] sm:$0xff pattern:$0x75316420]
          %v728 = vld.sshfl [vmem:[#allocation1 + $0x28] sm:$0xff pattern:$0x75316420]
          %v729 = vld.sshfl [vmem:[#allocation1 + $0x30] sm:$0xff pattern:$0x75316420]
          %v730 = vld.sshfl [vmem:[#allocation1 + $0x38] sm:$0xff pattern:$0x75316420]
          %v747 = vsel %vm370, %v711, 0.0
          %v748 = vsel %vm370, %v712, 0.0
          %v749 = vadd.f32 %v747, %v748
          %v750 = vsel %vm370, %v713, 0.0
          %v751 = vadd.f32 %v749, %v750
          %v752 = vsel %vm370, %v714, 0.0
          %v753 = vadd.f32 %v751, %v752
          %v754 = vsel %vm370, %v715, 0.0
          %v755 = vadd.f32 %v753, %v754
          %v756 = vsel %vm370, %v716, 0.0
          %v757 = vadd.f32 %v755, %v756
          %v758 = vsel %vm370, %v717, 0.0
          %v759 = vadd.f32 %v757, %v758
          %v760 = vsel %vm370, %v718, 0.0
          %v761 = vadd.f32 %v759, %v760
          %v762 = vsel %vm370, %v723, 0.0
          %v763 = vadd.f32 %v761, %v762
          %v764 = vsel %vm370, %v724, 0.0
          %v765 = vadd.f32 %v763, %v764
          %v766 = vsel %vm370, %v725, 0.0
          %v767 = vadd.f32 %v765, %v766
          %v768 = vsel %vm370, %v726, 0.0
          %v769 = vadd.f32 %v767, %v768
          %v770 = vsel %vm370, %v727, 0.0
          %v771 = vadd.f32 %v769, %v770
          %v772 = vsel %vm370, %v728, 0.0
          %v773 = vadd.f32 %v771, %v772
          %v774 = vsel %vm370, %v729, 0.0
          %v775 = vadd.f32 %v773, %v774
          %v776 = vsel %vm370, %v730, 0.0
          %v777 = vadd.f32 %v775, %v776
          %778 = vadd.xlane.f32.xlu0 %v777
          %v779 = vpop.xlane.xlu0 %778
          %v780 = vrot.slane %v779, 4
          %v781 = vadd.f32 %v779, %v780
          %v782 = vrot.slane %v781, 2
          %v783 = vadd.f32 %v781, %v782
          %v784 = vrot.slane %v783, 1
          %v785 = vadd.f32 %v783, %v784
          %s786 = vtos %v785
          %v787 = vstv %s786
          %v788 = vadd.f32 %v787, 0.0
          %vm789 = vcmask 0
          %790 = vst.msk [vmem:[%s220] sm:$0x1] %vm789, %v788
        $region44: #{tpu_custom_call.1} parent=27 // pred_fallthru
          _
        %p791 = scmp.lt.s32.totalorder %s23, 1
        %s792 = scalar_select %p791, %s23, 1
        %s793 = scalar_lea.vmem %s2, %s792
        // Predicated region
        $region45: #{tpu_custom_call.1} parent=27 // pred_check
          %p794 = pneg %p105
        $region46: #{tpu_custom_call.1} parent=27 // pred_check_branch
          %796 = sbr.rel (%p794) target = $region48
        $region47: #{tpu_custom_call.1} parent=27 // pred_region
          _
        $region48: #{tpu_custom_call.1} parent=27 // pred_fallthru
          _
      $region28: #{tpu_custom_call.1} parent=5 // pred_fallthru
        _
      %p797 = scmp.le.s32.totalorder 2, %s14
      // Predicated region
      $region49: #{tpu_custom_call.1} parent=5 // pred_check
        %p798 = pneg %p797
      $region50: #{tpu_custom_call.1} parent=5 // pred_check_branch
        %800 = sbr.rel (%p798) target = $region52
      $region51: #{tpu_custom_call.1} parent=5 // pred_region
        %s801 = ssub.s32 %s14, 2
        // Predicated region
        $region53: #{tpu_custom_call.1} parent=51 // pred_check
          %p802 = pneg %p111
        $region54: #{tpu_custom_call.1} parent=51 // pred_check_branch
          %804 = sbr.rel (%p802) target = $region56
        $region55: #{tpu_custom_call.1} parent=51 // pred_region
          %p805 = scmp.lt.s32.totalorder %s25, 1
          %s806 = scalar_select %p805, %s25, 1
          %s807 = scalar_lea.vmem %s2, %s806
        $region56: #{tpu_custom_call.1} parent=51 // pred_fallthru
          _
      $region52: #{tpu_custom_call.1} parent=5 // pred_fallthru
        _
    $region6: #{tpu_custom_call.1} parent=1 // loop_footer
      %s18 = sadd.s32 1, %s14
    $region7: #{tpu_custom_call.1} parent=1 // loop_footer_branch
      %13 = sbr.rel target = $region3
    $region8: #{tpu_custom_call.1} parent=1 // loop_exit
      _
    %808 = vsyncpa [#allocation4], 1
    %s809 = scalar_lea.sflag [#allocation4], 1
    %810 = vsyncpa %s809, 1
    %811 = vsyncpa [#allocation6], 1
    %s812 = scalar_lea.sflag [#allocation6], 1
    %813 = vsyncpa %s812, 1

</llo_original>
